<compile_context>
chip_gen: v5e
topology: v5e:2x2
jax: 0.10.0
libtpu: 0.0.40
codegen_flags: <defaults>
</compile_context>

<pallas_src>
import functools

import jax
import jax.numpy as jnp
import numpy as np
from jax import lax
from jax.experimental import pallas as pl
from jax.experimental.pallas import tpu as pltpu

_BN_EPS = 1e-5


def _round_up(x, m):
    return ((x + m - 1) // m) * m


# ---------------------------------------------------------------------------
# Kernel 1: 1x1 conv (matmul over pixels, BN scale pre-folded into w) + bias
# + ReLU.  Tiled over the pixel dimension ("parallel" axis).
# ---------------------------------------------------------------------------
def _conv1x1_bias_relu_kernel(x_ref, w_ref, bias_ref, o_ref):
    y = jnp.dot(x_ref[...], w_ref[...], preferred_element_type=jnp.float32)
    o_ref[...] = jnp.maximum(y + bias_ref[...], 0.0).astype(o_ref.dtype)


def conv1x1_bn_relu(x_nhwc, w_folded, bias, tm=512):
    N, H, W, Cin = x_nhwc.shape
    Cout = w_folded.shape[1]
    M = N * H * W
    xf = x_nhwc.reshape(M, Cin)

    tm = min(tm, _round_up(M, 8))          # tile rows (multiple of 8)
    Mp = _round_up(M, tm)
    if Mp != M:
        xf = jnp.pad(xf, ((0, Mp - M), (0, 0)))

    out = pl.pallas_call(
        _conv1x1_bias_relu_kernel,
        out_shape=jax.ShapeDtypeStruct((Mp, Cout), x_nhwc.dtype),
        grid=(Mp // tm,),
        in_specs=[
            pl.BlockSpec((tm, Cin), lambda i: (i, 0)),
            pl.BlockSpec((Cin, Cout), lambda i: (0, 0)),
            pl.BlockSpec((1, Cout), lambda i: (0, 0)),
        ],
        out_specs=pl.BlockSpec((tm, Cout), lambda i: (i, 0)),
        compiler_params=pltpu.CompilerParams(
            dimension_semantics=("parallel",)),
    )(xf, w_folded, bias.reshape(1, Cout))

    if Mp != M:
        out = out[:M]
    return out.reshape(N, H, W, Cout)


# ---------------------------------------------------------------------------
# Kernel 2: 3x3 dilated conv (9 shifted-tap matmuls, BN scale pre-folded)
# + bias + ReLU.  Grid = (batch, row tiles).  The padded input stays in HBM
# (memory_space=pl.ANY); each step DMAs only its TH + 2*d halo row slab into a
# VMEM scratch buffer.
# ---------------------------------------------------------------------------
def _dilated3x3_bias_relu_kernel(ypad_hbm, w_ref, bias_ref, o_ref, buf, sem,
                                 *, TH, W, d):
    n = pl.program_id(0)
    ti = pl.program_id(1)
    Cin = buf.shape[-1]
    Cout = o_ref.shape[-1]

    # Fetch this tile's halo slab: rows [ti*TH, ti*TH + TH + 2d) of the padded
    # image for batch n.
    row0 = pl.multiple_of(ti * TH, TH)
    cp = pltpu.make_async_copy(
        ypad_hbm.at[n, pl.ds(row0, TH + 2 * d)], buf, sem.at[0])
    cp.start()
    cp.wait()

    acc = jnp.zeros((TH * W, Cout), jnp.float32)
    for kh in range(3):
        for kw in range(3):
            patch = buf[kh * d: kh * d + TH, kw * d: kw * d + W, :]
            acc += jnp.dot(patch.reshape(TH * W, Cin), w_ref[kh * 3 + kw],
                           preferred_element_type=jnp.float32)
    out = jnp.maximum(acc + bias_ref[...], 0.0)
    o_ref[...] = out.reshape(TH, W, Cout).astype(o_ref.dtype)


def dilated_conv3x3_bn_relu(y_nhwc, w_folded, bias, d, th=32):
    N, H, W, Cin = y_nhwc.shape
    Cout = w_folded.shape[-1]

    th = min(th, H)                        # output rows per tile
    n_tiles = pl.cdiv(H, th)
    h_out = n_tiles * th
    pad_bottom = h_out - H

    # zero-pad: d on each side (conv padding) + bottom padding so row tiles
    # divide evenly (those extra output rows are sliced off afterwards).
    yp = jnp.pad(y_nhwc, ((0, 0), (d, d + pad_bottom), (d, d), (0, 0)))

    kernel = functools.partial(_dilated3x3_bias_relu_kernel, TH=th, W=W, d=d)
    out = pl.pallas_call(
        kernel,
        out_shape=jax.ShapeDtypeStruct((N, h_out, W, Cout), y_nhwc.dtype),
        grid=(N, n_tiles),
        in_specs=[
            pl.BlockSpec(memory_space=pl.ANY),              # padded y in HBM
            pl.BlockSpec((9, Cin, Cout), lambda n, t: (0, 0, 0)),
            pl.BlockSpec((1, Cout), lambda n, t: (0, 0)),
        ],
        out_specs=pl.BlockSpec((None, th, W, Cout), lambda n, t: (n, t, 0, 0)),
        scratch_shapes=[
            pltpu.VMEM((th + 2 * d, W + 2 * d, Cin), y_nhwc.dtype),
            pltpu.SemaphoreType.DMA((1,)),
        ],
        compiler_params=pltpu.CompilerParams(
            dimension_semantics=("parallel", "parallel"),
            vmem_limit_bytes=32 * 1024 * 1024),
    )(yp, w_folded, bias.reshape(1, Cout))

    if pad_bottom:
        out = out[:, :H]
    return out


# ---------------------------------------------------------------------------
# Parameter init (deterministic, synthetic) and module forward
# ---------------------------------------------------------------------------
def _fold_bn(gamma, beta, mean, var):
    scale = gamma / jnp.sqrt(var + _BN_EPS)
    bias = beta - mean * scale
    return scale, bias


def init_dense_aspp_conv(key, in_c, inter_c, out_c):
    ks = jax.random.split(key, 10)
    p = {
        "w1": 0.1 * jax.random.normal(ks[0], (in_c, inter_c), jnp.float32),
        "bn1_gamma": 1.0 + 0.1 * jax.random.normal(ks[1], (inter_c,), jnp.float32),
        "bn1_beta": 0.1 * jax.random.normal(ks[2], (inter_c,), jnp.float32),
        "bn1_mean": 0.1 * jax.random.normal(ks[3], (inter_c,), jnp.float32),
        "bn1_var": 0.5 + jax.random.uniform(ks[4], (inter_c,), jnp.float32),
        "w2": 0.1 * jax.random.normal(ks[5], (9, inter_c, out_c), jnp.float32),
        "bn2_gamma": 1.0 + 0.1 * jax.random.normal(ks[6], (out_c,), jnp.float32),
        "bn2_beta": 0.1 * jax.random.normal(ks[7], (out_c,), jnp.float32),
        "bn2_mean": 0.1 * jax.random.normal(ks[8], (out_c,), jnp.float32),
        "bn2_var": 0.5 + jax.random.uniform(ks[9], (out_c,), jnp.float32),
    }
    return p


def dense_aspp_conv(x_nhwc, p, dilate):
    # Fold BN scale into the conv weights (tiny tensors, done once by XLA);
    # kernels only add the folded bias.
    s1, b1 = _fold_bn(p["bn1_gamma"], p["bn1_beta"], p["bn1_mean"], p["bn1_var"])
    w1 = p["w1"] * s1[None, :]
    y = conv1x1_bn_relu(x_nhwc, w1, b1)
    s2, b2 = _fold_bn(p["bn2_gamma"], p["bn2_beta"], p["bn2_mean"], p["bn2_var"])
    w2 = p["w2"] * s2[None, None, :]
    return dilated_conv3x3_bn_relu(y, w2, b2, dilate)


def init_dense_aspp_block(key, in_c, inter_c1, inter_c2):
    dilations = (3, 6, 12, 18, 24)
    params = []
    for i, _ in enumerate(dilations):
        key, sub = jax.random.split(key)
        params.append(init_dense_aspp_conv(sub, in_c + i * inter_c2,
                                           inter_c1, inter_c2))
    return params, dilations


def dense_aspp_block(x_nchw, params, dilations):
    # NCHW -> NHWC for the kernels, back to NCHW at the end.
    # Note: the dense concatenation is kept in XLA; writing each branch
    # directly into a channel slice of a preallocated buffer would need
    # lane-aligned (>=128) channel widths to be expressible as out-blocks.
    x = jnp.transpose(x_nchw, (0, 2, 3, 1))
    for p, d in zip(params, dilations):
        a = dense_aspp_conv(x, p, d)
        x = jnp.concatenate([a, x], axis=-1)   # matches torch.cat(dim=1)
    return jnp.transpose(x, (0, 3, 1, 2))


# ---------------------------------------------------------------------------
# Pure-JAX reference (for validation)
# ---------------------------------------------------------------------------
def _ref_dense_aspp_conv(x_nhwc, p, d):
    in_c = p["w1"].shape[0]
    inter_c = p["w1"].shape[1]
    out_c = p["w2"].shape[-1]
    s1, b1 = _fold_bn(p["bn1_gamma"], p["bn1_beta"], p["bn1_mean"], p["bn1_var"])
    y = lax.conv_general_dilated(
        x_nhwc, p["w1"].reshape(1, 1, in_c, inter_c), (1, 1), "VALID",
        dimension_numbers=("NHWC", "HWIO", "NHWC"))
    y = jnp.maximum(y * s1 + b1, 0.0)
    s2, b2 = _fold_bn(p["bn2_gamma"], p["bn2_beta"], p["bn2_mean"], p["bn2_var"])
    z = lax.conv_general_dilated(
        y, p["w2"].reshape(3, 3, inter_c, out_c), (1, 1),
        [(d, d), (d, d)], rhs_dilation=(d, d),
        dimension_numbers=("NHWC", "HWIO", "NHWC"))
    return jnp.maximum(z * s2 + b2, 0.0)


def _ref_dense_aspp_block(x_nchw, params, dilations):
    x = jnp.transpose(x_nchw, (0, 2, 3, 1))
    for p, d in zip(params, dilations):
        a = _ref_dense_aspp_conv(x, p, d)
        x = jnp.concatenate([a, x], axis=-1)
    return jnp.transpose(x, (0, 3, 1, 2))


if __name__ == "__main__":
    in_c, inter_c1, inter_c2 = 4, 8, 4
    N, H, W = 2, 16, 16

    key = jax.random.PRNGKey(0)
    key, xk = jax.random.split(key)
    x = jax.random.normal(xk, (N, in_c, H, W), jnp.float32)

    params, dilations = init_dense_aspp_block(key, in_c, inter_c1, inter_c2)

    out = dense_aspp_block(x, params, dilations)
    out = jax.block_until_ready(out)

    expected_channels = in_c + 5 * inter_c2
    assert out.shape == (N, expected_channels, H, W), out.shape

    ref = jax.block_until_ready(_ref_dense_aspp_block(x, params, dilations))
    np.testing.assert_allclose(np.asarray(out), np.asarray(ref),
                               rtol=1e-4, atol=1e-4)

    print("KERNEL_OK")
</pallas_src>

<mosaic_0001>
module attributes {stable_mosaic.version = 11 : i64} {
  func.func @_conv1x1_bias_relu_kernel(%arg0: i32, %arg1: memref<512x4xf32, #tpu.memory_space<vmem>>, %arg2: memref<4x8xf32, #tpu.memory_space<vmem>>, %arg3: memref<1x8xf32, #tpu.memory_space<vmem>>, %arg4: memref<512x8xf32, #tpu.memory_space<vmem>>) attributes {dimension_semantics = [#tpu.dimension_semantics<parallel>], iteration_bounds = array<i64: 1>, scalar_prefetch = 0 : i64, scratch_operands = 0 : i64, tpu.core_type = #tpu.core_type<tc>, window_params = [{transform_indices = @transform_0, window_bounds = array<i64: 512, 4>}, {pipeline_mode = #tpu.pipeline_mode<synchronous>, transform_indices = @transform_1, window_bounds = array<i64: 4, 8>}, {pipeline_mode = #tpu.pipeline_mode<synchronous>, transform_indices = @transform_2, window_bounds = array<i64: 1, 8>}, {transform_indices = @transform_3, window_bounds = array<i64: 512, 8>}]} {
    %c0 = arith.constant 0 : index
    %c0_0 = arith.constant 0 : index
    %0 = vector.load %arg1[%c0, %c0_0] : memref<512x4xf32, #tpu.memory_space<vmem>>, vector<512x4xf32>
    %c0_1 = arith.constant 0 : index
    %c0_2 = arith.constant 0 : index
    %1 = vector.load %arg2[%c0_1, %c0_2] : memref<4x8xf32, #tpu.memory_space<vmem>>, vector<4x8xf32>
    %cst = arith.constant dense<0.000000e+00> : vector<512x8xf32>
    %2 = tpu.matmul %0, %1, %cst {dimension_numbers = #tpu.dot_dimension_numbers<[1], [0], [0], [1], [0, 0, 1, 1], [], []>} : vector<512x4xf32>, vector<4x8xf32>, vector<512x8xf32> -> vector<512x8xf32>
    %c0_3 = arith.constant 0 : index
    %c0_4 = arith.constant 0 : index
    %3 = vector.load %arg3[%c0_3, %c0_4] : memref<1x8xf32, #tpu.memory_space<vmem>>, vector<1x8xf32>
    %4 = vector.broadcast %3 : vector<1x8xf32> to vector<512x8xf32>
    %5 = arith.addf %2, %4 : vector<512x8xf32>
    %cst_5 = arith.constant 0.000000e+00 : f32
    %6 = vector.broadcast %cst_5 : f32 to vector<512x8xf32>
    %7 = arith.maximumf %5, %6 : vector<512x8xf32>
    %c0_6 = arith.constant 0 : index
    %c0_7 = arith.constant 0 : index
    %8 = vector.load %arg4[%c0_6, %c0_7] : memref<512x8xf32, #tpu.memory_space<vmem>>, vector<512x8xf32>
    tpu.vector_store %arg4[%c0_6, %c0_7], %7 {strides = array<i32>} : memref<512x8xf32, #tpu.memory_space<vmem>>, vector<512x8xf32>,
    return
  }
  func.func @transform_0(%arg0: i32) -> (i32, i32) {
    %c0_i32 = arith.constant 0 : i32
    %c0_i32_0 = arith.constant 0 : i32
    return %arg0, %c0_i32 : i32, i32
  }
  func.func @transform_1(%arg0: i32) -> (i32, i32) {
    %c0_i32 = arith.constant 0 : i32
    %c0_i32_0 = arith.constant 0 : i32
    %c0_i32_1 = arith.constant 0 : i32
    return %c0_i32, %c0_i32_0 : i32, i32
  }
  func.func @transform_2(%arg0: i32) -> (i32, i32) {
    %c0_i32 = arith.constant 0 : i32
    %c0_i32_0 = arith.constant 0 : i32
    %c0_i32_1 = arith.constant 0 : i32
    return %c0_i32, %c0_i32_0 : i32, i32
  }
  func.func @transform_3(%arg0: i32) -> (i32, i32) {
    %c0_i32 = arith.constant 0 : i32
    %c0_i32_0 = arith.constant 0 : i32
    return %arg0, %c0_i32 : i32, i32
  }
}

</mosaic_0001>

<llo_original>
// kernel: tpu_custom_call.1
$region0: #{tpu_custom_call.1}
  #allocation0 [shape = 'u32[]', space=smem, size = 0x4, offset = 0x4, fixed_abs, tag = 'smem constant byte address 0x4 - core index']
  #allocation1 [shape = 'u32[72,128]{1,0:T(1,128)}', space=vmem, size = 0x9000, scoped, tag = 'internal scratch']
  %s0 = inlined_call_operand.vmem [shape: f32[512,4], index: 0, kind: input, shape index: {}]
  %s1 = inlined_call_operand.vmem [shape: f32[4,8], index: 1, kind: input, shape index: {}]
  %s2 = inlined_call_operand.vmem [shape: f32[1,8], index: 2, kind: input, shape index: {}]
  %s3 = inlined_call_operand.vmem [shape: f32[512,8], index: 3, kind: output, shape index: {}]
  %s4 = sld [smem:[#allocation0]]
  $region22: #{tpu_custom_call.1} parent=0
    _
  %s6 = ssub.s32 1, %s4
  %s7 = scalar_select 0, %s6, %s4
  // Predicated region
  $region2: #{tpu_custom_call.1} parent=0 // pred_check
    _
  $region3: #{tpu_custom_call.1} parent=0 // pred_check_branch
    %9 = sbr.rel (0) target = $region5
  $region4: #{tpu_custom_call.1} parent=0 // pred_region
    _
  $region5: #{tpu_custom_call.1} parent=0 // pred_fallthru
    _
  // Predicated region
  $region6: #{tpu_custom_call.1} parent=0 // pred_check
    _
  $region7: #{tpu_custom_call.1} parent=0 // pred_check_branch
    %11 = sbr.rel (0) target = $region9
  $region8: #{tpu_custom_call.1} parent=0 // pred_region
    _
  $region9: #{tpu_custom_call.1} parent=0 // pred_fallthru
    _
  // Predicated region
  $region10: #{tpu_custom_call.1} parent=0 // pred_check
    _
  $region11: #{tpu_custom_call.1} parent=0 // pred_check_branch
    %13 = sbr.rel (0) target = $region13
  $region12: #{tpu_custom_call.1} parent=0 // pred_region
    _
  $region13: #{tpu_custom_call.1} parent=0 // pred_fallthru
    _
  %v14 = vld [vmem:[%s0] sm:$0xff]
  %v15 = vld [vmem:[%s0 + $0x8] sm:$0xff]
  %v16 = vld [vmem:[%s0 + $0x10] sm:$0xff]
  %v17 = vld [vmem:[%s0 + $0x18] sm:$0xff]
  %v18 = vld [vmem:[%s0 + $0x20] sm:$0xff]
  %v19 = vld [vmem:[%s0 + $0x28] sm:$0xff]
  %v20 = vld [vmem:[%s0 + $0x30] sm:$0xff]
  %v21 = vld [vmem:[%s0 + $0x38] sm:$0xff]
  %v22 = vld [vmem:[%s0 + $0x40] sm:$0xff]
  %v23 = vld [vmem:[%s0 + $0x48] sm:$0xff]
  %v24 = vld [vmem:[%s0 + $0x50] sm:$0xff]
  %v25 = vld [vmem:[%s0 + $0x58] sm:$0xff]
  %v26 = vld [vmem:[%s0 + $0x60] sm:$0xff]
  %v27 = vld [vmem:[%s0 + $0x68] sm:$0xff]
  %v28 = vld [vmem:[%s0 + $0x70] sm:$0xff]
  %v29 = vld [vmem:[%s0 + $0x78] sm:$0xff]
  %v30 = vld [vmem:[%s0 + $0x80] sm:$0xff]
  %v31 = vld [vmem:[%s0 + $0x88] sm:$0xff]
  %v32 = vld [vmem:[%s0 + $0x90] sm:$0xff]
  %v33 = vld [vmem:[%s0 + $0x98] sm:$0xff]
  %v34 = vld [vmem:[%s0 + $0xa0] sm:$0xff]
  %v35 = vld [vmem:[%s0 + $0xa8] sm:$0xff]
  %v36 = vld [vmem:[%s0 + $0xb0] sm:$0xff]
  %v37 = vld [vmem:[%s0 + $0xb8] sm:$0xff]
  %v38 = vld [vmem:[%s0 + $0xc0] sm:$0xff]
  %v39 = vld [vmem:[%s0 + $0xc8] sm:$0xff]
  %v40 = vld [vmem:[%s0 + $0xd0] sm:$0xff]
  %v41 = vld [vmem:[%s0 + $0xd8] sm:$0xff]
  %v42 = vld [vmem:[%s0 + $0xe0] sm:$0xff]
  %v43 = vld [vmem:[%s0 + $0xe8] sm:$0xff]
  %v44 = vld [vmem:[%s0 + $0xf0] sm:$0xff]
  %v45 = vld [vmem:[%s0 + $0xf8] sm:$0xff]
  %v46 = vld [vmem:[%s0 + $0x100] sm:$0xff]
  %v47 = vld [vmem:[%s0 + $0x108] sm:$0xff]
  %v48 = vld [vmem:[%s0 + $0x110] sm:$0xff]
  %v49 = vld [vmem:[%s0 + $0x118] sm:$0xff]
  %v50 = vld [vmem:[%s0 + $0x120] sm:$0xff]
  %v51 = vld [vmem:[%s0 + $0x128] sm:$0xff]
  %v52 = vld [vmem:[%s0 + $0x130] sm:$0xff]
  %v53 = vld [vmem:[%s0 + $0x138] sm:$0xff]
  %v54 = vld [vmem:[%s0 + $0x140] sm:$0xff]
  %v55 = vld [vmem:[%s0 + $0x148] sm:$0xff]
  %v56 = vld [vmem:[%s0 + $0x150] sm:$0xff]
  %v57 = vld [vmem:[%s0 + $0x158] sm:$0xff]
  %v58 = vld [vmem:[%s0 + $0x160] sm:$0xff]
  %v59 = vld [vmem:[%s0 + $0x168] sm:$0xff]
  %v60 = vld [vmem:[%s0 + $0x170] sm:$0xff]
  %v61 = vld [vmem:[%s0 + $0x178] sm:$0xff]
  %v62 = vld [vmem:[%s0 + $0x180] sm:$0xff]
  %v63 = vld [vmem:[%s0 + $0x188] sm:$0xff]
  %v64 = vld [vmem:[%s0 + $0x190] sm:$0xff]
  %v65 = vld [vmem:[%s0 + $0x198] sm:$0xff]
  %v66 = vld [vmem:[%s0 + $0x1a0] sm:$0xff]
  %v67 = vld [vmem:[%s0 + $0x1a8] sm:$0xff]
  %v68 = vld [vmem:[%s0 + $0x1b0] sm:$0xff]
  %v69 = vld [vmem:[%s0 + $0x1b8] sm:$0xff]
  %v70 = vld [vmem:[%s0 + $0x1c0] sm:$0xff]
  %v71 = vld [vmem:[%s0 + $0x1c8] sm:$0xff]
  %v72 = vld [vmem:[%s0 + $0x1d0] sm:$0xff]
  %v73 = vld [vmem:[%s0 + $0x1d8] sm:$0xff]
  %v74 = vld [vmem:[%s0 + $0x1e0] sm:$0xff]
  %v75 = vld [vmem:[%s0 + $0x1e8] sm:$0xff]
  %v76 = vld [vmem:[%s0 + $0x1f0] sm:$0xff]
  %v77 = vld [vmem:[%s0 + $0x1f8] sm:$0xff]
  %v78 = vld [vmem:[%s1] sm:$0xf]
  %v79 = vld [vmem:[%s2] sm:$0x1]
  %v81 = vperm.slane %v79, 0
  %vm83 = vcmask 31744
  %v85 = vsel %vm83, %v14, 0
  %v88 = vsel %vm83, %v15, 0
  %v91 = vsel %vm83, %v16, 0
  %v94 = vsel %vm83, %v17, 0
  %v97 = vsel %vm83, %v18, 0
  %v100 = vsel %vm83, %v19, 0
  %v103 = vsel %vm83, %v20, 0
  %v106 = vsel %vm83, %v21, 0
  %v109 = vsel %vm83, %v22, 0
  %v112 = vsel %vm83, %v23, 0
  %v115 = vsel %vm83, %v24, 0
  %v118 = vsel %vm83, %v25, 0
  %v121 = vsel %vm83, %v26, 0
  %v124 = vsel %vm83, %v27, 0
  %v127 = vsel %vm83, %v28, 0
  %v130 = vsel %vm83, %v29, 0
  %v133 = vsel %vm83, %v30, 0
  %v136 = vsel %vm83, %v31, 0
  %v139 = vsel %vm83, %v32, 0
  %v142 = vsel %vm83, %v33, 0
  %v145 = vsel %vm83, %v34, 0
  %v148 = vsel %vm83, %v35, 0
  %v151 = vsel %vm83, %v36, 0
  %v154 = vsel %vm83, %v37, 0
  %v157 = vsel %vm83, %v38, 0
  %v160 = vsel %vm83, %v39, 0
  %v163 = vsel %vm83, %v40, 0
  %v166 = vsel %vm83, %v41, 0
  %v169 = vsel %vm83, %v42, 0
  %v172 = vsel %vm83, %v43, 0
  %v175 = vsel %vm83, %v44, 0
  %v178 = vsel %vm83, %v45, 0
  %v181 = vsel %vm83, %v46, 0
  %v184 = vsel %vm83, %v47, 0
  %v187 = vsel %vm83, %v48, 0
  %v190 = vsel %vm83, %v49, 0
  %v193 = vsel %vm83, %v50, 0
  %v196 = vsel %vm83, %v51, 0
  %v199 = vsel %vm83, %v52, 0
  %v202 = vsel %vm83, %v53, 0
  %v205 = vsel %vm83, %v54, 0
  %v208 = vsel %vm83, %v55, 0
  %v211 = vsel %vm83, %v56, 0
  %v214 = vsel %vm83, %v57, 0
  %v217 = vsel %vm83, %v58, 0
  %v220 = vsel %vm83, %v59, 0
  %v223 = vsel %vm83, %v60, 0
  %v226 = vsel %vm83, %v61, 0
  %v229 = vsel %vm83, %v62, 0
  %v232 = vsel %vm83, %v63, 0
  %v235 = vsel %vm83, %v64, 0
  %v238 = vsel %vm83, %v65, 0
  %v241 = vsel %vm83, %v66, 0
  %v244 = vsel %vm83, %v67, 0
  %v247 = vsel %vm83, %v68, 0
  %v250 = vsel %vm83, %v69, 0
  %v253 = vsel %vm83, %v70, 0
  %v256 = vsel %vm83, %v71, 0
  %v259 = vsel %vm83, %v72, 0
  %v262 = vsel %vm83, %v73, 0
  %v265 = vsel %vm83, %v74, 0
  %v268 = vsel %vm83, %v75, 0
  %v271 = vsel %vm83, %v76, 0
  %v274 = vsel %vm83, %v77, 0
  %vm276 = vcmask 1043456
  %v278 = vsel %vm276, %v78, 0
  %280 = vmatpush.msra.mxu0 0.0
  %281 = vmatpush.msra.mxu0 0.0
  %282 = vmatpush.msra.mxu0 0.0
  %283 = vmatpush.msra.mxu0 0.0
  %284 = vmatpush.msra.mxu0 0.0
  %285 = vmatpush.msra.mxu0 0.0
  %286 = vmatpush.msra.mxu0 0.0
  %287 = vmatpush.msra.mxu0 0.0
  %288 = vmatpush.msra.mxu0 0.0
  %289 = vmatpush.msra.mxu0 0.0
  %290 = vmatpush.msra.mxu0 0.0
  %291 = vmatpush.msra.mxu0 0.0
  %292 = vmatpush.msra.mxu0 0.0
  %293 = vmatpush.msra.mxu0 0.0
  %294 = vmatpush.msra.mxu0 0.0
  %295 = vmatpush.msra.mxu0 %v278
  %296 = vmatmul.f32.gmra.mxu0 %v85
  %v297 = vpop.f32.mrf.mxu0
  %v298 = vadd.f32 %v81, %v297
  %299 = vmatmul.f32.gmra.mxu0 %v88
  %v300 = vpop.f32.mrf.mxu0
  %v301 = vadd.f32 %v81, %v300
  %302 = vmatmul.f32.gmra.mxu0 %v91
  %v303 = vpop.f32.mrf.mxu0
  %v304 = vadd.f32 %v81, %v303
  %305 = vmatmul.f32.gmra.mxu0 %v94
  %v306 = vpop.f32.mrf.mxu0
  %v307 = vadd.f32 %v81, %v306
  %308 = vmatmul.f32.gmra.mxu0 %v97
  %v309 = vpop.f32.mrf.mxu0
  %v310 = vadd.f32 %v81, %v309
  %311 = vmatmul.f32.gmra.mxu0 %v100
  %v312 = vpop.f32.mrf.mxu0
  %v313 = vadd.f32 %v81, %v312
  %314 = vmatmul.f32.gmra.mxu0 %v103
  %v315 = vpop.f32.mrf.mxu0
  %v316 = vadd.f32 %v81, %v315
  %317 = vmatmul.f32.gmra.mxu0 %v106
  %v318 = vpop.f32.mrf.mxu0
  %v319 = vadd.f32 %v81, %v318
  %320 = vmatmul.f32.gmra.mxu0 %v109
  %v321 = vpop.f32.mrf.mxu0
  %v322 = vadd.f32 %v81, %v321
  %323 = vmatmul.f32.gmra.mxu0 %v112
  %v324 = vpop.f32.mrf.mxu0
  %v325 = vadd.f32 %v81, %v324
  %326 = vmatmul.f32.gmra.mxu0 %v115
  %v327 = vpop.f32.mrf.mxu0
  %v328 = vadd.f32 %v81, %v327
  %329 = vmatmul.f32.gmra.mxu0 %v118
  %v330 = vpop.f32.mrf.mxu0
  %v331 = vadd.f32 %v81, %v330
  %332 = vmatmul.f32.gmra.mxu0 %v121
  %v333 = vpop.f32.mrf.mxu0
  %v334 = vadd.f32 %v81, %v333
  %335 = vmatmul.f32.gmra.mxu0 %v124
  %v336 = vpop.f32.mrf.mxu0
  %v337 = vadd.f32 %v81, %v336
  %338 = vmatmul.f32.gmra.mxu0 %v127
  %v339 = vpop.f32.mrf.mxu0
  %v340 = vadd.f32 %v81, %v339
  %341 = vmatmul.f32.gmra.mxu0 %v130
  %v342 = vpop.f32.mrf.mxu0
  %v343 = vadd.f32 %v81, %v342
  %344 = vmatmul.f32.gmra.mxu0 %v133
  %v345 = vpop.f32.mrf.mxu0
  %v346 = vadd.f32 %v81, %v345
  %347 = vmatmul.f32.gmra.mxu0 %v136
  %v348 = vpop.f32.mrf.mxu0
  %v349 = vadd.f32 %v81, %v348
  %350 = vmatmul.f32.gmra.mxu0 %v139
  %v351 = vpop.f32.mrf.mxu0
  %v352 = vadd.f32 %v81, %v351
  %353 = vmatmul.f32.gmra.mxu0 %v142
  %v354 = vpop.f32.mrf.mxu0
  %v355 = vadd.f32 %v81, %v354
  %356 = vmatmul.f32.gmra.mxu0 %v145
  %v357 = vpop.f32.mrf.mxu0
  %v358 = vadd.f32 %v81, %v357
  %359 = vmatmul.f32.gmra.mxu0 %v148
  %v360 = vpop.f32.mrf.mxu0
  %v361 = vadd.f32 %v81, %v360
  %362 = vmatmul.f32.gmra.mxu0 %v151
  %v363 = vpop.f32.mrf.mxu0
  %v364 = vadd.f32 %v81, %v363
  %365 = vmatmul.f32.gmra.mxu0 %v154
  %v366 = vpop.f32.mrf.mxu0
  %v367 = vadd.f32 %v81, %v366
  %368 = vmatmul.f32.gmra.mxu0 %v157
  %v369 = vpop.f32.mrf.mxu0
  %v370 = vadd.f32 %v81, %v369
  %371 = vmatmul.f32.gmra.mxu0 %v160
  %v372 = vpop.f32.mrf.mxu0
  %v373 = vadd.f32 %v81, %v372
  %374 = vmatmul.f32.gmra.mxu0 %v163
  %v375 = vpop.f32.mrf.mxu0
  %v376 = vadd.f32 %v81, %v375
  %377 = vmatmul.f32.gmra.mxu0 %v166
  %v378 = vpop.f32.mrf.mxu0
  %v379 = vadd.f32 %v81, %v378
  %380 = vmatmul.f32.gmra.mxu0 %v169
  %v381 = vpop.f32.mrf.mxu0
  %v382 = vadd.f32 %v81, %v381
  %383 = vmatmul.f32.gmra.mxu0 %v172
  %v384 = vpop.f32.mrf.mxu0
  %v385 = vadd.f32 %v81, %v384
  %386 = vmatmul.f32.gmra.mxu0 %v175
  %v387 = vpop.f32.mrf.mxu0
  %v388 = vadd.f32 %v81, %v387
  %389 = vmatmul.f32.gmra.mxu0 %v178
  %v390 = vpop.f32.mrf.mxu0
  %v391 = vadd.f32 %v81, %v390
  %392 = vmatmul.f32.gmra.mxu0 %v181
  %v393 = vpop.f32.mrf.mxu0
  %v394 = vadd.f32 %v81, %v393
  %395 = vmatmul.f32.gmra.mxu0 %v184
  %v396 = vpop.f32.mrf.mxu0
  %v397 = vadd.f32 %v81, %v396
  %398 = vmatmul.f32.gmra.mxu0 %v187
  %v399 = vpop.f32.mrf.mxu0
  %v400 = vadd.f32 %v81, %v399
  %401 = vmatmul.f32.gmra.mxu0 %v190
  %v402 = vpop.f32.mrf.mxu0
  %v403 = vadd.f32 %v81, %v402
  %404 = vmatmul.f32.gmra.mxu0 %v193
  %v405 = vpop.f32.mrf.mxu0
  %v406 = vadd.f32 %v81, %v405
  %407 = vmatmul.f32.gmra.mxu0 %v196
  %v408 = vpop.f32.mrf.mxu0
  %v409 = vadd.f32 %v81, %v408
  %410 = vmatmul.f32.gmra.mxu0 %v199
  %v411 = vpop.f32.mrf.mxu0
  %v412 = vadd.f32 %v81, %v411
  %413 = vmatmul.f32.gmra.mxu0 %v202
  %v414 = vpop.f32.mrf.mxu0
  %v415 = vadd.f32 %v81, %v414
  %416 = vmatmul.f32.gmra.mxu0 %v205
  %v417 = vpop.f32.mrf.mxu0
  %v418 = vadd.f32 %v81, %v417
  %419 = vmatmul.f32.gmra.mxu0 %v208
  %v420 = vpop.f32.mrf.mxu0
  %v421 = vadd.f32 %v81, %v420
  %422 = vmatmul.f32.gmra.mxu0 %v211
  %v423 = vpop.f32.mrf.mxu0
  %v424 = vadd.f32 %v81, %v423
  %425 = vmatmul.f32.gmra.mxu0 %v214
  %v426 = vpop.f32.mrf.mxu0
  %v427 = vadd.f32 %v81, %v426
  %428 = vmatmul.f32.gmra.mxu0 %v217
  %v429 = vpop.f32.mrf.mxu0
  %v430 = vadd.f32 %v81, %v429
  %431 = vmatmul.f32.gmra.mxu0 %v220
  %v432 = vpop.f32.mrf.mxu0
  %v433 = vadd.f32 %v81, %v432
  %434 = vmatmul.f32.gmra.mxu0 %v223
  %v435 = vpop.f32.mrf.mxu0
  %v436 = vadd.f32 %v81, %v435
  %437 = vmatmul.f32.gmra.mxu0 %v226
  %v438 = vpop.f32.mrf.mxu0
  %v439 = vadd.f32 %v81, %v438
  %440 = vmatmul.f32.gmra.mxu0 %v229
  %v441 = vpop.f32.mrf.mxu0
  %v442 = vadd.f32 %v81, %v441
  %443 = vmatmul.f32.gmra.mxu0 %v232
  %v444 = vpop.f32.mrf.mxu0
  %v445 = vadd.f32 %v81, %v444
  %446 = vmatmul.f32.gmra.mxu0 %v235
  %v447 = vpop.f32.mrf.mxu0
  %v448 = vadd.f32 %v81, %v447
  %449 = vmatmul.f32.gmra.mxu0 %v238
  %v450 = vpop.f32.mrf.mxu0
  %v451 = vadd.f32 %v81, %v450
  %452 = vmatmul.f32.gmra.mxu0 %v241
  %v453 = vpop.f32.mrf.mxu0
  %v454 = vadd.f32 %v81, %v453
  %455 = vmatmul.f32.gmra.mxu0 %v244
  %v456 = vpop.f32.mrf.mxu0
  %v457 = vadd.f32 %v81, %v456
  %458 = vmatmul.f32.gmra.mxu0 %v247
  %v459 = vpop.f32.mrf.mxu0
  %v460 = vadd.f32 %v81, %v459
  %461 = vmatmul.f32.gmra.mxu0 %v250
  %v462 = vpop.f32.mrf.mxu0
  %v463 = vadd.f32 %v81, %v462
  %464 = vmatmul.f32.gmra.mxu0 %v253
  %v465 = vpop.f32.mrf.mxu0
  %v466 = vadd.f32 %v81, %v465
  %467 = vmatmul.f32.gmra.mxu0 %v256
  %v468 = vpop.f32.mrf.mxu0
  %v469 = vadd.f32 %v81, %v468
  %470 = vmatmul.f32.gmra.mxu0 %v259
  %v471 = vpop.f32.mrf.mxu0
  %v472 = vadd.f32 %v81, %v471
  %473 = vmatmul.f32.gmra.mxu0 %v262
  %v474 = vpop.f32.mrf.mxu0
  %v475 = vadd.f32 %v81, %v474
  %476 = vmatmul.f32.gmra.mxu0 %v265
  %v477 = vpop.f32.mrf.mxu0
  %v478 = vadd.f32 %v81, %v477
  %479 = vmatmul.f32.gmra.mxu0 %v268
  %v480 = vpop.f32.mrf.mxu0
  %v481 = vadd.f32 %v81, %v480
  %482 = vmatmul.f32.gmra.mxu0 %v271
  %v483 = vpop.f32.mrf.mxu0
  %v484 = vadd.f32 %v81, %v483
  %485 = vmatmul.f32.gmra.mxu0 %v274
  %v486 = vpop.f32.mrf.mxu0
  %v487 = vadd.f32 %v81, %v486
  %488 = vdwg.mxu0
  %v489 = vmax.f32 %v298, 0.0
  %v490 = vmax.f32 %v301, 0.0
  %v491 = vmax.f32 %v304, 0.0
  %v492 = vmax.f32 %v307, 0.0
  %v493 = vmax.f32 %v310, 0.0
  %v494 = vmax.f32 %v313, 0.0
  %v495 = vmax.f32 %v316, 0.0
  %v496 = vmax.f32 %v319, 0.0
  %v497 = vmax.f32 %v322, 0.0
  %v498 = vmax.f32 %v325, 0.0
  %v499 = vmax.f32 %v328, 0.0
  %v500 = vmax.f32 %v331, 0.0
  %v501 = vmax.f32 %v334, 0.0
  %v502 = vmax.f32 %v337, 0.0
  %v503 = vmax.f32 %v340, 0.0
  %v504 = vmax.f32 %v343, 0.0
  %v505 = vmax.f32 %v346, 0.0
  %v506 = vmax.f32 %v349, 0.0
  %v507 = vmax.f32 %v352, 0.0
  %v508 = vmax.f32 %v355, 0.0
  %v509 = vmax.f32 %v358, 0.0
  %v510 = vmax.f32 %v361, 0.0
  %v511 = vmax.f32 %v364, 0.0
  %v512 = vmax.f32 %v367, 0.0
  %v513 = vmax.f32 %v370, 0.0
  %v514 = vmax.f32 %v373, 0.0
  %v515 = vmax.f32 %v376, 0.0
  %v516 = vmax.f32 %v379, 0.0
  %v517 = vmax.f32 %v382, 0.0
  %v518 = vmax.f32 %v385, 0.0
  %v519 = vmax.f32 %v388, 0.0
  %v520 = vmax.f32 %v391, 0.0
  %v521 = vmax.f32 %v394, 0.0
  %v522 = vmax.f32 %v397, 0.0
  %v523 = vmax.f32 %v400, 0.0
  %v524 = vmax.f32 %v403, 0.0
  %v525 = vmax.f32 %v406, 0.0
  %v526 = vmax.f32 %v409, 0.0
  %v527 = vmax.f32 %v412, 0.0
  %v528 = vmax.f32 %v415, 0.0
  %v529 = vmax.f32 %v418, 0.0
  %v530 = vmax.f32 %v421, 0.0
  %v531 = vmax.f32 %v424, 0.0
  %v532 = vmax.f32 %v427, 0.0
  %v533 = vmax.f32 %v430, 0.0
  %v534 = vmax.f32 %v433, 0.0
  %v535 = vmax.f32 %v436, 0.0
  %v536 = vmax.f32 %v439, 0.0
  %v537 = vmax.f32 %v442, 0.0
  %v538 = vmax.f32 %v445, 0.0
  %v539 = vmax.f32 %v448, 0.0
  %v540 = vmax.f32 %v451, 0.0
  %v541 = vmax.f32 %v454, 0.0
  %v542 = vmax.f32 %v457, 0.0
  %v543 = vmax.f32 %v460, 0.0
  %v544 = vmax.f32 %v463, 0.0
  %v545 = vmax.f32 %v466, 0.0
  %v546 = vmax.f32 %v469, 0.0
  %v547 = vmax.f32 %v472, 0.0
  %v548 = vmax.f32 %v475, 0.0
  %v549 = vmax.f32 %v478, 0.0
  %v550 = vmax.f32 %v481, 0.0
  %v551 = vmax.f32 %v484, 0.0
  %v552 = vmax.f32 %v487, 0.0
  %vm553 = vcmask 64512
  %554 = vst.msk [vmem:[%s3] sm:$0xff] %vm553, %v489
  %555 = vst.msk [vmem:[%s3 + $0x8] sm:$0xff] %vm553, %v490
  %556 = vst.msk [vmem:[%s3 + $0x10] sm:$0xff] %vm553, %v491
  %557 = vst.msk [vmem:[%s3 + $0x18] sm:$0xff] %vm553, %v492
  %558 = vst.msk [vmem:[%s3 + $0x20] sm:$0xff] %vm553, %v493
  %559 = vst.msk [vmem:[%s3 + $0x28] sm:$0xff] %vm553, %v494
  %560 = vst.msk [vmem:[%s3 + $0x30] sm:$0xff] %vm553, %v495
  %561 = vst.msk [vmem:[%s3 + $0x38] sm:$0xff] %vm553, %v496
  %562 = vst.msk [vmem:[%s3 + $0x40] sm:$0xff] %vm553, %v497
  %563 = vst.msk [vmem:[%s3 + $0x48] sm:$0xff] %vm553, %v498
  %564 = vst.msk [vmem:[%s3 + $0x50] sm:$0xff] %vm553, %v499
  %565 = vst.msk [vmem:[%s3 + $0x58] sm:$0xff] %vm553, %v500
  %566 = vst.msk [vmem:[%s3 + $0x60] sm:$0xff] %vm553, %v501
  %567 = vst.msk [vmem:[%s3 + $0x68] sm:$0xff] %vm553, %v502
  %568 = vst.msk [vmem:[%s3 + $0x70] sm:$0xff] %vm553, %v503
  %569 = vst.msk [vmem:[%s3 + $0x78] sm:$0xff] %vm553, %v504
  %570 = vst.msk [vmem:[%s3 + $0x80] sm:$0xff] %vm553, %v505
  %571 = vst.msk [vmem:[%s3 + $0x88] sm:$0xff] %vm553, %v506
  %572 = vst.msk [vmem:[%s3 + $0x90] sm:$0xff] %vm553, %v507
  %573 = vst.msk [vmem:[%s3 + $0x98] sm:$0xff] %vm553, %v508
  %574 = vst.msk [vmem:[%s3 + $0xa0] sm:$0xff] %vm553, %v509
  %575 = vst.msk [vmem:[%s3 + $0xa8] sm:$0xff] %vm553, %v510
  %576 = vst.msk [vmem:[%s3 + $0xb0] sm:$0xff] %vm553, %v511
  %577 = vst.msk [vmem:[%s3 + $0xb8] sm:$0xff] %vm553, %v512
  %578 = vst.msk [vmem:[%s3 + $0xc0] sm:$0xff] %vm553, %v513
  %579 = vst.msk [vmem:[%s3 + $0xc8] sm:$0xff] %vm553, %v514
  %580 = vst.msk [vmem:[%s3 + $0xd0] sm:$0xff] %vm553, %v515
  %581 = vst.msk [vmem:[%s3 + $0xd8] sm:$0xff] %vm553, %v516
  %582 = vst.msk [vmem:[%s3 + $0xe0] sm:$0xff] %vm553, %v517
  %583 = vst.msk [vmem:[%s3 + $0xe8] sm:$0xff] %vm553, %v518
  %584 = vst.msk [vmem:[%s3 + $0xf0] sm:$0xff] %vm553, %v519
  %585 = vst.msk [vmem:[%s3 + $0xf8] sm:$0xff] %vm553, %v520
  %586 = vst.msk [vmem:[%s3 + $0x100] sm:$0xff] %vm553, %v521
  %587 = vst.msk [vmem:[%s3 + $0x108] sm:$0xff] %vm553, %v522
  %588 = vst.msk [vmem:[%s3 + $0x110] sm:$0xff] %vm553, %v523
  %589 = vst.msk [vmem:[%s3 + $0x118] sm:$0xff] %vm553, %v524
  %590 = vst.msk [vmem:[%s3 + $0x120] sm:$0xff] %vm553, %v525
  %591 = vst.msk [vmem:[%s3 + $0x128] sm:$0xff] %vm553, %v526
  %592 = vst.msk [vmem:[%s3 + $0x130] sm:$0xff] %vm553, %v527
  %593 = vst.msk [vmem:[%s3 + $0x138] sm:$0xff] %vm553, %v528
  %594 = vst.msk [vmem:[%s3 + $0x140] sm:$0xff] %vm553, %v529
  %595 = vst.msk [vmem:[%s3 + $0x148] sm:$0xff] %vm553, %v530
  %596 = vst.msk [vmem:[%s3 + $0x150] sm:$0xff] %vm553, %v531
  %597 = vst.msk [vmem:[%s3 + $0x158] sm:$0xff] %vm553, %v532
  %598 = vst.msk [vmem:[%s3 + $0x160] sm:$0xff] %vm553, %v533
  %599 = vst.msk [vmem:[%s3 + $0x168] sm:$0xff] %vm553, %v534
  %600 = vst.msk [vmem:[%s3 + $0x170] sm:$0xff] %vm553, %v535
  %601 = vst.msk [vmem:[%s3 + $0x178] sm:$0xff] %vm553, %v536
  %602 = vst.msk [vmem:[%s3 + $0x180] sm:$0xff] %vm553, %v537
  %603 = vst.msk [vmem:[%s3 + $0x188] sm:$0xff] %vm553, %v538
  %604 = vst.msk [vmem:[%s3 + $0x190] sm:$0xff] %vm553, %v539
  %605 = vst.msk [vmem:[%s3 + $0x198] sm:$0xff] %vm553, %v540
  %606 = vst.msk [vmem:[%s3 + $0x1a0] sm:$0xff] %vm553, %v541
  %607 = vst.msk [vmem:[%s3 + $0x1a8] sm:$0xff] %vm553, %v542
  %608 = vst.msk [vmem:[%s3 + $0x1b0] sm:$0xff] %vm553, %v543
  %609 = vst.msk [vmem:[%s3 + $0x1b8] sm:$0xff] %vm553, %v544
  %610 = vst.msk [vmem:[%s3 + $0x1c0] sm:$0xff] %vm553, %v545
  %611 = vst.msk [vmem:[%s3 + $0x1c8] sm:$0xff] %vm553, %v546
  %612 = vst.msk [vmem:[%s3 + $0x1d0] sm:$0xff] %vm553, %v547
  %613 = vst.msk [vmem:[%s3 + $0x1d8] sm:$0xff] %vm553, %v548
  %614 = vst.msk [vmem:[%s3 + $0x1e0] sm:$0xff] %vm553, %v549
  %615 = vst.msk [vmem:[%s3 + $0x1e8] sm:$0xff] %vm553, %v550
  %616 = vst.msk [vmem:[%s3 + $0x1f0] sm:$0xff] %vm553, %v551
  %617 = vst.msk [vmem:[%s3 + $0x1f8] sm:$0xff] %vm553, %v552
  // Predicated region
  $region14: #{tpu_custom_call.1} parent=0 // pred_check
    _
  $region15: #{tpu_custom_call.1} parent=0 // pred_check_branch
    %619 = sbr.rel (0) target = $region17
  $region16: #{tpu_custom_call.1} parent=0 // pred_region
    _
  $region17: #{tpu_custom_call.1} parent=0 // pred_fallthru
    _
  // Predicated region
  $region18: #{tpu_custom_call.1} parent=0 // pred_check
    _
  $region19: #{tpu_custom_call.1} parent=0 // pred_check_branch
    %621 = sbr.rel (0) target = $region21
  $region20: #{tpu_custom_call.1} parent=0 // pred_region
    _
  $region21: #{tpu_custom_call.1} parent=0 // pred_fallthru
    _

</llo_original>
